<compile_context>
chip_gen: v5e
topology: v5e:2x2
jax: 0.10.0
libtpu: 0.0.40
codegen_flags: <defaults>
</compile_context>

<pallas_src>
import jax
import jax.numpy as jnp
from jax.experimental import pallas as pl
from jax.experimental.pallas import tpu as pltpu


def encoder_head_kernel(x_ref, w_ref, b_ref, o_ref):
    # x_ref : (TB, HW, C)  feature-map tile (bf16 or f32), spatial flattened on sublanes
    # w_ref : (C, E)       embed weight, pre-transposed (torch Linear stores (E, C))
    # b_ref : (1, E)       embed bias
    # o_ref : (TB, E)
    hw = x_ref.shape[1]

    # AdaptiveAvgPool2d((1,1)) == spatial mean per channel.
    # Sum with an f32 accumulator (no f32 copy of the big tile), multiply by 1/HW.
    pooled = jnp.sum(x_ref[...], axis=1, dtype=jnp.float32) * (1.0 / hw)   # (TB, C) f32

    # view(B, -1) is a no-op here; nn.Linear: pooled @ W.T + b.
    # Cast only the small pooled tile to the weight dtype so the MXU runs native
    # bf16 x bf16 (or f32 x f32) with an f32 accumulator.
    out = jnp.dot(pooled.astype(w_ref.dtype), w_ref[...],
                  preferred_element_type=jnp.float32)
    out = out + b_ref[...].astype(jnp.float32)                              # (TB, E) f32

    o_ref[...] = out.astype(o_ref.dtype)


def _pick_batch_tile(batch, target=32):
    """Largest divisor of `batch` that is <= target (keeps the grid exact)."""
    tb = min(batch, target)
    while batch % tb:
        tb -= 1
    return tb


def encoder_cnn_head(feat_nhwc, w_embed, b_embed, *, tb=None):
    """Pallas fused head: AdaptiveAvgPool2d(1) -> view(B, -1) -> Linear(embed).

    feat_nhwc : (B, H, W, C)  trunk output feature map, NHWC (JAX conv native layout;
                              the NCHW->NHWC relayout is pushed into the trunk, so the
                              wrapper does no extra HBM transpose pass)
    w_embed   : (E, C)        nn.Linear weight (PyTorch convention)
    b_embed   : (E,)          nn.Linear bias
    returns   : (B, E)        in feat_nhwc.dtype
    """
    B, H, W, C = feat_nhwc.shape
    E = w_embed.shape[0]
    HW = H * W

    # Free, contiguous reshape (no data movement); tiny one-time weight relayout.
    x = feat_nhwc.reshape(B, HW, C)
    w_t = jnp.transpose(w_embed)        # (C, E), kept in its input dtype (bf16 ok)
    b = b_embed.reshape(1, E)

    if tb is None:
        tb = _pick_batch_tile(B)
    grid = (B // tb,)

    return pl.pallas_call(
        encoder_head_kernel,
        out_shape=jax.ShapeDtypeStruct((B, E), feat_nhwc.dtype),
        grid=grid,
        in_specs=[
            pl.BlockSpec((tb, HW, C), lambda i: (i, 0, 0)),   # streamed, double-buffered
            pl.BlockSpec((C, E), lambda i: (0, 0)),           # resident weight
            pl.BlockSpec((1, E), lambda i: (0, 0)),           # resident bias
        ],
        out_specs=pl.BlockSpec((tb, E), lambda i: (i, 0)),
        compiler_params=pltpu.CompilerParams(
            dimension_semantics=("parallel",)),
    )(x, w_t, b)


if __name__ == "__main__":
    # --- Test 1: small f32 shapes, tight tolerance --------------------------------
    B, C_feat, H, W = 2, 256, 4, 4
    embed_size = 128

    k_feat, k_w, k_b = jax.random.split(jax.random.PRNGKey(0), 3)

    # Synthetic trunk feature map in NHWC (stands in for resnet children[:-2](images)).
    feat = jax.random.normal(k_feat, (B, H, W, C_feat), dtype=jnp.float32)

    # nn.Linear(embed) init (PyTorch default: U(-1/sqrt(in), 1/sqrt(in))).
    bound = 1.0 / (C_feat ** 0.5)
    w_embed = jax.random.uniform(k_w, (embed_size, C_feat), jnp.float32, -bound, bound)
    b_embed = jax.random.uniform(k_b, (embed_size,), jnp.float32, -bound, bound)

    out = jax.block_until_ready(encoder_cnn_head(feat, w_embed, b_embed))

    ref = feat.reshape(B, H * W, C_feat).mean(axis=1) @ w_embed.T + b_embed
    assert out.shape == (B, embed_size)
    assert jnp.allclose(out, ref, atol=1e-5, rtol=1e-5)

    # --- Test 2: bf16 streaming path, batch-tiled grid (ResNet-50-like, scaled) ---
    B2, C2, H2, W2, E2 = 16, 512, 7, 7, 256
    k4, k5, k6 = jax.random.split(jax.random.PRNGKey(0), 3)

    feat2 = jax.random.normal(k4, (B2, H2, W2, C2), jnp.float32).astype(jnp.bfloat16)
    bound2 = 1.0 / (C2 ** 0.5)
    w2 = jax.random.uniform(k5, (E2, C2), jnp.float32, -bound2, bound2).astype(jnp.bfloat16)
    b2 = jax.random.uniform(k6, (E2,), jnp.float32, -bound2, bound2).astype(jnp.bfloat16)

    out2 = jax.block_until_ready(encoder_cnn_head(feat2, w2, b2, tb=8))  # grid=(2,)

    ref2 = (feat2.astype(jnp.float32).reshape(B2, H2 * W2, C2).mean(axis=1)
            @ w2.astype(jnp.float32).T + b2.astype(jnp.float32))
    assert out2.shape == (B2, E2)
    assert out2.dtype == jnp.bfloat16
    assert jnp.allclose(out2.astype(jnp.float32), ref2, atol=5e-2, rtol=5e-2)

    print("KERNEL_OK")
</pallas_src>

<mosaic_0001>
module attributes {stable_mosaic.version = 11 : i64} {
  func.func @encoder_head_kernel(%arg0: i32, %arg1: memref<2x16x256xf32, #tpu.memory_space<vmem>>, %arg2: memref<256x128xf32, #tpu.memory_space<vmem>>, %arg3: memref<1x128xf32, #tpu.memory_space<vmem>>, %arg4: memref<2x128xf32, #tpu.memory_space<vmem>>) attributes {dimension_semantics = [#tpu.dimension_semantics<parallel>], iteration_bounds = array<i64: 1>, scalar_prefetch = 0 : i64, scratch_operands = 0 : i64, tpu.core_type = #tpu.core_type<tc>, window_params = [{transform_indices = @transform_0, window_bounds = array<i64: 2, 16, 256>}, {pipeline_mode = #tpu.pipeline_mode<synchronous>, transform_indices = @transform_1, window_bounds = array<i64: 256, 128>}, {pipeline_mode = #tpu.pipeline_mode<synchronous>, transform_indices = @transform_2, window_bounds = array<i64: 1, 128>}, {transform_indices = @transform_3, window_bounds = array<i64: 2, 128>}]} {
    %c0 = arith.constant 0 : index
    %c0_0 = arith.constant 0 : index
    %c0_1 = arith.constant 0 : index
    %0 = vector.load %arg1[%c0, %c0_0, %c0_1] : memref<2x16x256xf32, #tpu.memory_space<vmem>>, vector<2x16x256xf32>
    %cst = arith.constant dense<0.000000e+00> : vector<2x256xf32>
    %1 = vector.multi_reduction <add>, %0, %cst [1] : vector<2x16x256xf32> to vector<2x256xf32>
    %cst_2 = arith.constant 6.250000e-02 : f32
    %2 = vector.broadcast %cst_2 : f32 to vector<2x256xf32>
    %3 = arith.mulf %1, %2 : vector<2x256xf32>
    %c0_3 = arith.constant 0 : index
    %c0_4 = arith.constant 0 : index
    %4 = vector.load %arg2[%c0_3, %c0_4] : memref<256x128xf32, #tpu.memory_space<vmem>>, vector<256x128xf32>
    %cst_5 = arith.constant dense<0.000000e+00> : vector<2x128xf32>
    %5 = tpu.matmul %3, %4, %cst_5 {dimension_numbers = #tpu.dot_dimension_numbers<[1], [0], [0], [1], [0, 0, 1, 1], [], []>} : vector<2x256xf32>, vector<256x128xf32>, vector<2x128xf32> -> vector<2x128xf32>
    %c0_6 = arith.constant 0 : index
    %c0_7 = arith.constant 0 : index
    %6 = vector.load %arg3[%c0_6, %c0_7] : memref<1x128xf32, #tpu.memory_space<vmem>>, vector<1x128xf32>
    %7 = vector.broadcast %6 : vector<1x128xf32> to vector<2x128xf32>
    %8 = arith.addf %5, %7 : vector<2x128xf32>
    %c0_8 = arith.constant 0 : index
    %c0_9 = arith.constant 0 : index
    %9 = vector.load %arg4[%c0_8, %c0_9] : memref<2x128xf32, #tpu.memory_space<vmem>>, vector<2x128xf32>
    tpu.vector_store %arg4[%c0_8, %c0_9], %8 {strides = array<i32>} : memref<2x128xf32, #tpu.memory_space<vmem>>, vector<2x128xf32>,
    return
  }
  func.func @transform_0(%arg0: i32) -> (i32, i32, i32) {
    %c0_i32 = arith.constant 0 : i32
    %c0_i32_0 = arith.constant 0 : i32
    %c0_i32_1 = arith.constant 0 : i32
    return %arg0, %c0_i32, %c0_i32_0 : i32, i32, i32
  }
  func.func @transform_1(%arg0: i32) -> (i32, i32) {
    %c0_i32 = arith.constant 0 : i32
    %c0_i32_0 = arith.constant 0 : i32
    %c0_i32_1 = arith.constant 0 : i32
    return %c0_i32, %c0_i32_0 : i32, i32
  }
  func.func @transform_2(%arg0: i32) -> (i32, i32) {
    %c0_i32 = arith.constant 0 : i32
    %c0_i32_0 = arith.constant 0 : i32
    %c0_i32_1 = arith.constant 0 : i32
    return %c0_i32, %c0_i32_0 : i32, i32
  }
  func.func @transform_3(%arg0: i32) -> (i32, i32) {
    %c0_i32 = arith.constant 0 : i32
    %c0_i32_0 = arith.constant 0 : i32
    return %arg0, %c0_i32 : i32, i32
  }
}

</mosaic_0001>

<llo_original>
// kernel: tpu_custom_call.1
$region0: #{tpu_custom_call.1}
  #allocation0 [shape = 'u32[]', space=smem, size = 0x4, offset = 0x4, fixed_abs, tag = 'smem constant byte address 0x4 - core index']
  #allocation1 [shape = 'u32[72,128]{1,0:T(1,128)}', space=vmem, size = 0x9000, scoped, tag = 'internal scratch']
  %s0 = inlined_call_operand.hbm [shape: f32[2,16,256], index: 0, kind: input, shape index: {}]
  %s1 = inlined_call_operand.hbm [shape: f32[256,128], index: 1, kind: input, shape index: {}]
  %s2 = inlined_call_operand.vmem [shape: f32[1,128], index: 2, kind: input, shape index: {}]
  %s3 = inlined_call_operand.hbm [shape: f32[2,128], index: 3, kind: output, shape index: {}]
  %s4 = sld [smem:[#allocation0]]
  $region30: #{tpu_custom_call.1} parent=0
    _
  %s6 = ssub.s32 1, %s4
  %s7 = scalar_select 0, %s6, %s4
  $region1: #{tpu_custom_call.1} parent=0
    #allocation2 [shape = 'u8[32768]{0}', space=vmem, size = 0x8000, scoped, tag = 'input window, operand 0, single buffered']
    #allocation3 [shape = 's32[1]{0}', space=sflag, size = 0x4, scoped, tag = 'scoped memory for tpu_custom_call.1']
    #allocation4 [shape = 's32[1]{0}', space=sflag, size = 0x4, scoped, tag = 'scoped memory for tpu_custom_call.1']
    #allocation5 [shape = 'u8[131072]{0}', space=vmem, size = 0x20000, scoped, tag = 'input window, operand 1, single buffered']
    #allocation6 [shape = 's32[1]{0}', space=sflag, size = 0x4, scoped, tag = 'scoped memory for tpu_custom_call.1']
    #allocation7 [shape = 'u8[1024]{0}', space=vmem, size = 0x400, scoped, tag = 'output window, operand 0, single buffered']
    %8 = vsyncpa [#allocation3], 0
    %9 = vsyncpa [#allocation6], 0
    %10 = vsyncpa [#allocation4], 0
    // Predicated region
    $region2: #{tpu_custom_call.1} parent=1 // pred_check
      _
    $region3: #{tpu_custom_call.1} parent=1 // pred_check_branch
      %12 = sbr.rel (0) target = $region5
    $region4: #{tpu_custom_call.1} parent=1 // pred_region
      %14 = vsyncadd [#allocation3], 0
      %s15 = sshll.u32 %s0, 4
      %s16 = int_to_ptr.hbm [resolvable:$true] %s15
      %s17 = sshll.u32 [#allocation2], 4
      %s18 = int_to_ptr.vmem [resolvable:$true] %s17
      %23 = dma.hbm_to_vmem [thread:$0]  %s16, 1024, %s18, [#allocation3], 256, 256, 16
    $region5: #{tpu_custom_call.1} parent=1 // pred_fallthru
      _
    // Predicated region
    $region6: #{tpu_custom_call.1} parent=1 // pred_check
      _
    $region7: #{tpu_custom_call.1} parent=1 // pred_check_branch
      %25 = sbr.rel (0) target = $region9
    $region8: #{tpu_custom_call.1} parent=1 // pred_region
      %27 = vsyncadd [#allocation6], 0
      %s28 = sshll.u32 %s1, 4
      %s29 = int_to_ptr.hbm [resolvable:$true] %s28
      %s30 = sshll.u32 [#allocation5], 4
      %s31 = int_to_ptr.vmem [resolvable:$true] %s30
      %36 = dma.hbm_to_vmem [thread:$0]  %s29, 4096, %s31, [#allocation6], 128, 128, 8
    $region9: #{tpu_custom_call.1} parent=1 // pred_fallthru
      _
    // Predicated region
    $region10: #{tpu_custom_call.1} parent=1 // pred_check
      _
    $region11: #{tpu_custom_call.1} parent=1 // pred_check_branch
      %38 = sbr.rel (0) target = $region13
    $region12: #{tpu_custom_call.1} parent=1 // pred_region
      _
    $region13: #{tpu_custom_call.1} parent=1 // pred_fallthru
      _
    // Predicated region
    $region14: #{tpu_custom_call.1} parent=1 // pred_check
      _
    $region15: #{tpu_custom_call.1} parent=1 // pred_check_branch
      %40 = sbr.rel (0) target = $region17
    $region16: #{tpu_custom_call.1} parent=1 // pred_region
      %42 = dma.done [#allocation3], 1024
    $region17: #{tpu_custom_call.1} parent=1 // pred_fallthru
      _
    // Predicated region
    $region18: #{tpu_custom_call.1} parent=1 // pred_check
      _
    $region19: #{tpu_custom_call.1} parent=1 // pred_check_branch
      %44 = sbr.rel (0) target = $region21
    $region20: #{tpu_custom_call.1} parent=1 // pred_region
      %46 = dma.done [#allocation6], 4096
    $region21: #{tpu_custom_call.1} parent=1 // pred_fallthru
      _
    %v47 = vld [vmem:[#allocation2] sm:$0xff]
    %v48 = vld [vmem:[#allocation2 + $0x8] sm:$0xff]
    %v49 = vld [vmem:[#allocation2 + $0x10] sm:$0xff]
    %v50 = vld [vmem:[#allocation2 + $0x18] sm:$0xff]
    %v51 = vld [vmem:[#allocation2 + $0x20] sm:$0xff]
    %v52 = vld [vmem:[#allocation2 + $0x28] sm:$0xff]
    %v53 = vld [vmem:[#allocation2 + $0x30] sm:$0xff]
    %v54 = vld [vmem:[#allocation2 + $0x38] sm:$0xff]
    %v55 = vadd.f32 %v47, %v49
    %v56 = vrot.slane %v55, 4
    %v57 = vadd.f32 %v55, %v56
    %v58 = vrot.slane %v57, 2
    %v59 = vadd.f32 %v57, %v58
    %v60 = vrot.slane %v59, 1
    %v61 = vadd.f32 %v59, %v60
    %v62 = vadd.f32 %v48, %v50
    %v63 = vrot.slane %v62, 4
    %v64 = vadd.f32 %v62, %v63
    %v65 = vrot.slane %v64, 2
    %v66 = vadd.f32 %v64, %v65
    %v67 = vrot.slane %v66, 1
    %v68 = vadd.f32 %v66, %v67
    %v69 = vadd.f32 %v51, %v53
    %v70 = vrot.slane %v69, 4
    %v71 = vadd.f32 %v69, %v70
    %v72 = vrot.slane %v71, 2
    %v73 = vadd.f32 %v71, %v72
    %v74 = vrot.slane %v73, 1
    %v75 = vadd.f32 %v73, %v74
    %v76 = vadd.f32 %v52, %v54
    %v77 = vrot.slane %v76, 4
    %v78 = vadd.f32 %v76, %v77
    %v79 = vrot.slane %v78, 2
    %v80 = vadd.f32 %v78, %v79
    %v81 = vrot.slane %v80, 1
    %v82 = vadd.f32 %v80, %v81
    %v83 = vmul.f32 %v61, 0.0625
    %v84 = vmul.f32 %v68, 0.0625
    %v85 = vmul.f32 %v75, 0.0625
    %v86 = vmul.f32 %v82, 0.0625
    %v87 = vld [vmem:[#allocation5] sm:$0xff]
    %v88 = vld [vmem:[#allocation5 + $0x8] sm:$0xff]
    %v89 = vld [vmem:[#allocation5 + $0x10] sm:$0xff]
    %v90 = vld [vmem:[#allocation5 + $0x18] sm:$0xff]
    %v91 = vld [vmem:[#allocation5 + $0x20] sm:$0xff]
    %v92 = vld [vmem:[#allocation5 + $0x28] sm:$0xff]
    %v93 = vld [vmem:[#allocation5 + $0x30] sm:$0xff]
    %v94 = vld [vmem:[#allocation5 + $0x38] sm:$0xff]
    %v95 = vld [vmem:[#allocation5 + $0x40] sm:$0xff]
    %v96 = vld [vmem:[#allocation5 + $0x48] sm:$0xff]
    %v97 = vld [vmem:[#allocation5 + $0x50] sm:$0xff]
    %v98 = vld [vmem:[#allocation5 + $0x58] sm:$0xff]
    %v99 = vld [vmem:[#allocation5 + $0x60] sm:$0xff]
    %v100 = vld [vmem:[#allocation5 + $0x68] sm:$0xff]
    %v101 = vld [vmem:[#allocation5 + $0x70] sm:$0xff]
    %v102 = vld [vmem:[#allocation5 + $0x78] sm:$0xff]
    %v103 = vld [vmem:[#allocation5 + $0x80] sm:$0xff]
    %v104 = vld [vmem:[#allocation5 + $0x88] sm:$0xff]
    %v105 = vld [vmem:[#allocation5 + $0x90] sm:$0xff]
    %v106 = vld [vmem:[#allocation5 + $0x98] sm:$0xff]
    %v107 = vld [vmem:[#allocation5 + $0xa0] sm:$0xff]
    %v108 = vld [vmem:[#allocation5 + $0xa8] sm:$0xff]
    %v109 = vld [vmem:[#allocation5 + $0xb0] sm:$0xff]
    %v110 = vld [vmem:[#allocation5 + $0xb8] sm:$0xff]
    %v111 = vld [vmem:[#allocation5 + $0xc0] sm:$0xff]
    %v112 = vld [vmem:[#allocation5 + $0xc8] sm:$0xff]
    %v113 = vld [vmem:[#allocation5 + $0xd0] sm:$0xff]
    %v114 = vld [vmem:[#allocation5 + $0xd8] sm:$0xff]
    %v115 = vld [vmem:[#allocation5 + $0xe0] sm:$0xff]
    %v116 = vld [vmem:[#allocation5 + $0xe8] sm:$0xff]
    %v117 = vld [vmem:[#allocation5 + $0xf0] sm:$0xff]
    %v118 = vld [vmem:[#allocation5 + $0xf8] sm:$0xff]
    %v119 = vld [vmem:[%s2] sm:$0x1]
    %v121 = vperm.slane %v119, 0
    %vm127 = vcmask 1041409
    %v128 = vsel %vm127, %v85, %v83
    %v129 = vsel %vm127, %v86, %v84
    %132 = vmatpush.msra.mxu0 %v102
    %133 = vmatpush.msra.mxu0 %v101
    %134 = vmatpush.msra.mxu0 %v100
    %135 = vmatpush.msra.mxu0 %v99
    %136 = vmatpush.msra.mxu0 %v98
    %137 = vmatpush.msra.mxu0 %v97
    %138 = vmatpush.msra.mxu0 %v96
    %139 = vmatpush.msra.mxu0 %v95
    %140 = vmatpush.msra.mxu0 %v94
    %141 = vmatpush.msra.mxu0 %v93
    %142 = vmatpush.msra.mxu0 %v92
    %143 = vmatpush.msra.mxu0 %v91
    %144 = vmatpush.msra.mxu0 %v90
    %145 = vmatpush.msra.mxu0 %v89
    %146 = vmatpush.msra.mxu0 %v88
    %147 = vmatpush.msra.mxu0 %v87
    %148 = vmatmul.f32.gmra.mxu0 %v128
    %v149 = vpop.f32.mrf.mxu0
    %v150 = vadd.f32 %v121, %v149
    %151 = vdwg.mxu0
    %152 = vmatpush.msra.mxu0 %v118
    %153 = vmatpush.msra.mxu0 %v117
    %154 = vmatpush.msra.mxu0 %v116
    %155 = vmatpush.msra.mxu0 %v115
    %156 = vmatpush.msra.mxu0 %v114
    %157 = vmatpush.msra.mxu0 %v113
    %158 = vmatpush.msra.mxu0 %v112
    %159 = vmatpush.msra.mxu0 %v111
    %160 = vmatpush.msra.mxu0 %v110
    %161 = vmatpush.msra.mxu0 %v109
    %162 = vmatpush.msra.mxu0 %v108
    %163 = vmatpush.msra.mxu0 %v107
    %164 = vmatpush.msra.mxu0 %v106
    %165 = vmatpush.msra.mxu0 %v105
    %166 = vmatpush.msra.mxu0 %v104
    %167 = vmatpush.msra.mxu0 %v103
    %168 = vmatmul.f32.gmra.mxu0 %v129
    %v169 = vpop.f32.mrf.mxu0
    %v170 = vadd.f32 %v150, %v169
    %171 = vdwg.mxu0
    %172 = vst [vmem:[#allocation7] sm:$0x3] %v170
    // Predicated region
    $region22: #{tpu_custom_call.1} parent=1 // pred_check
      _
    $region23: #{tpu_custom_call.1} parent=1 // pred_check_branch
      %174 = sbr.rel (0) target = $region25
    $region24: #{tpu_custom_call.1} parent=1 // pred_region
      %176 = vsyncadd [#allocation4], 0
      %s178 = sshll.u32 [#allocation7], 4
      %s179 = int_to_ptr.vmem [resolvable:$true] %s178
      %s180 = sshll.u32 %s3, 4
      %s181 = int_to_ptr.hbm [resolvable:$true] %s180
      %183 = dma.vmem_to_hbm [thread:$0]  %s179, 32, %s181, [#allocation4]
    $region25: #{tpu_custom_call.1} parent=1 // pred_fallthru
      _
    // Predicated region
    $region26: #{tpu_custom_call.1} parent=1 // pred_check
      _
    $region27: #{tpu_custom_call.1} parent=1 // pred_check_branch
      %185 = sbr.rel (0) target = $region29
    $region28: #{tpu_custom_call.1} parent=1 // pred_region
      %187 = dma.done [#allocation4], 32
    $region29: #{tpu_custom_call.1} parent=1 // pred_fallthru
      _
    %188 = vsyncpa [#allocation3], 1
    %189 = vsyncpa [#allocation6], 1
    %190 = vsyncpa [#allocation4], 1

</llo_original>
